<compile_context>
chip_gen: v7x
topology: tpu7x:2x2x1
jax: 0.10.0
libtpu: 0.0.40
codegen_flags: <defaults>
</compile_context>

<pallas_src>
import functools

import jax
import jax.numpy as jnp
from jax.experimental import pallas as pl
from jax.experimental.pallas import tpu as pltpu


def _round_up(n, m):
    return ((n + m - 1) // m) * m


def _mlp_kernel(x_ref, w1_ref, b1_ref, w2_ref, b2_ref, probas_ref, logits_ref):
    # ---- layer 1: [TB, F] @ [F, 4] on the MXU, f32 accumulation, bias, relu.
    h = jnp.dot(x_ref[...], w1_ref[...], preferred_element_type=jnp.float32)
    h = jnp.maximum(h + b1_ref[...], 0.0)                     # [TB, H]

    # ---- layer 2: hidden = 4, so keep it OFF the MXU.  Unrolled VPU
    # broadcast-FMAs: logits = b2 + sum_k h[:, k] * w2[k, :].
    hidden = w2_ref.shape[0]                                   # static (== 4)
    n_cls = w2_ref.shape[1]
    logits = jnp.broadcast_to(b2_ref[...], (h.shape[0], n_cls)).astype(jnp.float32)
    w2 = w2_ref[...]
    for k in range(hidden):                                    # static unroll
        logits = logits + h[:, k : k + 1] * w2[k : k + 1, :]

    logits_ref[...] = logits
    # sigmoid -> EUP slot (exp/reciprocal), off the VALU/store critical path.
    probas_ref[...] = jax.nn.sigmoid(logits)
    # TODO(synk): if C were large in production, pack (logits || probas) into
    # one lane-dense [TB, 2*C] output (multiple of 128) to avoid masked stores.


@functools.partial(jax.jit, static_argnames=("block_batch",))
def mlp_forward(x, w1, b1, w2, b2, *, block_batch=None):
    """x: [B, F]; w1: [F, 4]; b1: [1, 4]; w2: [4, C]; b2: [1, C]."""
    x = x.astype(jnp.float32)  # matches x.float() in the PyTorch forward
    B, F = x.shape
    H, C = w2.shape

    # Batch tile: as large as reasonable (amortizes ~0.35us/step grid overhead,
    # keeps DMA pipelined), multiple of 8 sublanes.
    if block_batch is None:
        block_batch = min(512, _round_up(B, 8))
    TB = max(8, _round_up(block_batch, 8))

    # Pad batch so every grid step sees a full, valid tile (tail safety).
    Bp = _round_up(B, TB)
    if Bp != B:
        x = jnp.pad(x, ((0, Bp - B), (0, 0)))

    grid = (Bp // TB,)

    # VMEM budget: double-buffered x tile + 2 double-buffered output tiles
    # + resident weights/biases; 2x headroom, capped below v7x's 64 MiB VMEM.
    tile_bytes = 2 * (TB * F * 4) + 2 * 2 * (TB * C * 4) + (F * H + H + H * C + C) * 4
    vmem_limit = int(min(max(2 * tile_bytes, 16 * 1024 * 1024), 48 * 1024 * 1024))

    probas, logits = pl.pallas_call(
        _mlp_kernel,
        grid=grid,
        out_shape=(
            jax.ShapeDtypeStruct((Bp, C), jnp.float32),   # probas (FloatTensor)
            jax.ShapeDtypeStruct((Bp, C), jnp.float32),   # raw logits
        ),
        in_specs=[
            pl.BlockSpec((TB, F), lambda i: (i, 0)),      # x: tiled over batch
            pl.BlockSpec((F, H), lambda i: (0, 0)),       # w1: resident
            pl.BlockSpec((1, H), lambda i: (0, 0)),       # b1: resident
            pl.BlockSpec((H, C), lambda i: (0, 0)),       # w2: resident
            pl.BlockSpec((1, C), lambda i: (0, 0)),       # b2: resident
        ],
        out_specs=(
            pl.BlockSpec((TB, C), lambda i: (i, 0)),
            pl.BlockSpec((TB, C), lambda i: (i, 0)),
        ),
        compiler_params=pltpu.CompilerParams(
            dimension_semantics=("parallel",),            # megacore batch split
            vmem_limit_bytes=vmem_limit,
        ),
    )(x, w1, b1, w2, b2)

    if Bp != B:
        probas = probas[:B]
        logits = logits[:B]
    return probas, logits


def init_params(key, num_features, num_classes, hidden=4):
    """Deterministic init mimicking torch.nn.Linear's uniform(-1/sqrt(in), 1/sqrt(in))."""
    k1, k2, k3, k4 = jax.random.split(key, 4)
    bound1 = 1.0 / jnp.sqrt(jnp.float32(num_features))
    bound2 = 1.0 / jnp.sqrt(jnp.float32(hidden))
    # stored as [in, out] (transposed relative to torch's [out, in])
    w1 = jax.random.uniform(k1, (num_features, hidden), jnp.float32, -bound1, bound1)
    b1 = jax.random.uniform(k2, (1, hidden), jnp.float32, -bound1, bound1)
    w2 = jax.random.uniform(k3, (hidden, num_classes), jnp.float32, -bound2, bound2)
    b2 = jax.random.uniform(k4, (1, num_classes), jnp.float32, -bound2, bound2)
    return w1, b1, w2, b2


if __name__ == "__main__":
    key = jax.random.PRNGKey(0)
    kx, kp = jax.random.split(key)

    # Small shapes; batch=20 with block_batch=8 exercises the multi-step grid
    # AND the padded tail block (20 -> 24 padded -> 3 grid steps).
    batch = 20
    num_features = 16
    num_classes = 3

    x = jax.random.normal(kx, (batch, num_features), jnp.float32)
    w1, b1, w2, b2 = init_params(kp, num_features, num_classes)

    probas, logits = mlp_forward(x, w1, b1, w2, b2, block_batch=8)
    probas = jax.block_until_ready(probas)
    logits = jax.block_until_ready(logits)

    # Pure-JAX reference check
    h_ref = jnp.maximum(x @ w1 + b1, 0.0)
    logits_ref = h_ref @ w2 + b2
    probas_ref = jax.nn.sigmoid(logits_ref)
    assert logits.shape == (batch, num_classes) and probas.shape == (batch, num_classes)
    assert jnp.allclose(logits, logits_ref, atol=1e-5, rtol=1e-5)
    assert jnp.allclose(probas, probas_ref, atol=1e-5, rtol=1e-5)

    print("KERNEL_OK")
</pallas_src>

<mosaic_0001>
module attributes {stable_mosaic.version = 11 : i64} {
  func.func @_mlp_kernel(%arg0: i32, %arg1: memref<8x16xf32, #tpu.memory_space<vmem>>, %arg2: memref<16x4xf32, #tpu.memory_space<vmem>>, %arg3: memref<1x4xf32, #tpu.memory_space<vmem>>, %arg4: memref<4x3xf32, #tpu.memory_space<vmem>>, %arg5: memref<1x3xf32, #tpu.memory_space<vmem>>, %arg6: memref<8x3xf32, #tpu.memory_space<vmem>>, %arg7: memref<8x3xf32, #tpu.memory_space<vmem>>) attributes {dimension_semantics = [#tpu.dimension_semantics<parallel>], iteration_bounds = array<i64: 3>, scalar_prefetch = 0 : i64, scratch_operands = 0 : i64, tpu.core_type = #tpu.core_type<tc>, window_params = [{transform_indices = @transform_0, window_bounds = array<i64: 8, 16>}, {pipeline_mode = #tpu.pipeline_mode<synchronous>, transform_indices = @transform_1, window_bounds = array<i64: 16, 4>}, {pipeline_mode = #tpu.pipeline_mode<synchronous>, transform_indices = @transform_2, window_bounds = array<i64: 1, 4>}, {pipeline_mode = #tpu.pipeline_mode<synchronous>, transform_indices = @transform_3, window_bounds = array<i64: 4, 3>}, {pipeline_mode = #tpu.pipeline_mode<synchronous>, transform_indices = @transform_4, window_bounds = array<i64: 1, 3>}, {transform_indices = @transform_5, window_bounds = array<i64: 8, 3>}, {transform_indices = @transform_6, window_bounds = array<i64: 8, 3>}]} {
    %c0 = arith.constant 0 : index
    %c0_0 = arith.constant 0 : index
    %0 = vector.load %arg1[%c0, %c0_0] : memref<8x16xf32, #tpu.memory_space<vmem>>, vector<8x16xf32>
    %c0_1 = arith.constant 0 : index
    %c0_2 = arith.constant 0 : index
    %1 = vector.load %arg2[%c0_1, %c0_2] : memref<16x4xf32, #tpu.memory_space<vmem>>, vector<16x4xf32>
    %cst = arith.constant dense<0.000000e+00> : vector<8x4xf32>
    %2 = tpu.matmul %0, %1, %cst {dimension_numbers = #tpu.dot_dimension_numbers<[1], [0], [0], [1], [0, 0, 1, 1], [], []>} : vector<8x16xf32>, vector<16x4xf32>, vector<8x4xf32> -> vector<8x4xf32>
    %c0_3 = arith.constant 0 : index
    %c0_4 = arith.constant 0 : index
    %3 = vector.load %arg3[%c0_3, %c0_4] : memref<1x4xf32, #tpu.memory_space<vmem>>, vector<1x4xf32>
    %4 = vector.broadcast %3 : vector<1x4xf32> to vector<8x4xf32>
    %5 = arith.addf %2, %4 : vector<8x4xf32>
    %cst_5 = arith.constant 0.000000e+00 : f32
    %6 = vector.broadcast %cst_5 : f32 to vector<8x4xf32>
    %7 = arith.maximumf %5, %6 : vector<8x4xf32>
    %c0_6 = arith.constant 0 : index
    %c0_7 = arith.constant 0 : index
    %8 = vector.load %arg5[%c0_6, %c0_7] : memref<1x3xf32, #tpu.memory_space<vmem>>, vector<1x3xf32>
    %9 = vector.shape_cast %8 : vector<1x3xf32> to vector<1x3xf32>
    %10 = vector.broadcast %9 : vector<1x3xf32> to vector<8x3xf32>
    %c0_8 = arith.constant 0 : index
    %c0_9 = arith.constant 0 : index
    %11 = vector.load %arg4[%c0_8, %c0_9] : memref<4x3xf32, #tpu.memory_space<vmem>>, vector<4x3xf32>
    %12 = vector.extract_strided_slice %7 {offsets = [0, 0], sizes = [8, 1], strides = [1, 1]} : vector<8x4xf32> to vector<8x1xf32>
    %13 = vector.extract_strided_slice %11 {offsets = [0, 0], sizes = [1, 3], strides = [1, 1]} : vector<4x3xf32> to vector<1x3xf32>
    %14 = vector.broadcast %12 : vector<8x1xf32> to vector<8x3xf32>
    %15 = vector.broadcast %13 : vector<1x3xf32> to vector<8x3xf32>
    %16 = arith.mulf %14, %15 : vector<8x3xf32>
    %17 = arith.addf %10, %16 : vector<8x3xf32>
    %18 = vector.extract_strided_slice %7 {offsets = [0, 1], sizes = [8, 1], strides = [1, 1]} : vector<8x4xf32> to vector<8x1xf32>
    %19 = vector.extract_strided_slice %11 {offsets = [1, 0], sizes = [1, 3], strides = [1, 1]} : vector<4x3xf32> to vector<1x3xf32>
    %20 = vector.broadcast %18 : vector<8x1xf32> to vector<8x3xf32>
    %21 = vector.broadcast %19 : vector<1x3xf32> to vector<8x3xf32>
    %22 = arith.mulf %20, %21 : vector<8x3xf32>
    %23 = arith.addf %17, %22 : vector<8x3xf32>
    %24 = vector.extract_strided_slice %7 {offsets = [0, 2], sizes = [8, 1], strides = [1, 1]} : vector<8x4xf32> to vector<8x1xf32>
    %25 = vector.extract_strided_slice %11 {offsets = [2, 0], sizes = [1, 3], strides = [1, 1]} : vector<4x3xf32> to vector<1x3xf32>
    %26 = vector.broadcast %24 : vector<8x1xf32> to vector<8x3xf32>
    %27 = vector.broadcast %25 : vector<1x3xf32> to vector<8x3xf32>
    %28 = arith.mulf %26, %27 : vector<8x3xf32>
    %29 = arith.addf %23, %28 : vector<8x3xf32>
    %30 = vector.extract_strided_slice %7 {offsets = [0, 3], sizes = [8, 1], strides = [1, 1]} : vector<8x4xf32> to vector<8x1xf32>
    %31 = vector.extract_strided_slice %11 {offsets = [3, 0], sizes = [1, 3], strides = [1, 1]} : vector<4x3xf32> to vector<1x3xf32>
    %32 = vector.broadcast %30 : vector<8x1xf32> to vector<8x3xf32>
    %33 = vector.broadcast %31 : vector<1x3xf32> to vector<8x3xf32>
    %34 = arith.mulf %32, %33 : vector<8x3xf32>
    %35 = arith.addf %29, %34 : vector<8x3xf32>
    %c0_10 = arith.constant 0 : index
    %c0_11 = arith.constant 0 : index
    %36 = vector.load %arg7[%c0_10, %c0_11] : memref<8x3xf32, #tpu.memory_space<vmem>>, vector<8x3xf32>
    tpu.vector_store %arg7[%c0_10, %c0_11], %35 {strides = array<i32>} : memref<8x3xf32, #tpu.memory_space<vmem>>, vector<8x3xf32>,
    %37 = arith.negf %35 : vector<8x3xf32>
    %38 = math.exp %37 : vector<8x3xf32>
    %cst_12 = arith.constant 1.000000e+00 : f32
    %39 = vector.broadcast %cst_12 : f32 to vector<8x3xf32>
    %40 = arith.addf %39, %38 : vector<8x3xf32>
    %41 = arith.divf %39, %40 : vector<8x3xf32>
    %c0_13 = arith.constant 0 : index
    %c0_14 = arith.constant 0 : index
    %42 = vector.load %arg6[%c0_13, %c0_14] : memref<8x3xf32, #tpu.memory_space<vmem>>, vector<8x3xf32>
    tpu.vector_store %arg6[%c0_13, %c0_14], %41 {strides = array<i32>} : memref<8x3xf32, #tpu.memory_space<vmem>>, vector<8x3xf32>,
    return
  }
  func.func @transform_0(%arg0: i32) -> (i32, i32) {
    %c0_i32 = arith.constant 0 : i32
    %c0_i32_0 = arith.constant 0 : i32
    return %arg0, %c0_i32 : i32, i32
  }
  func.func @transform_1(%arg0: i32) -> (i32, i32) {
    %c0_i32 = arith.constant 0 : i32
    %c0_i32_0 = arith.constant 0 : i32
    %c0_i32_1 = arith.constant 0 : i32
    return %c0_i32, %c0_i32_0 : i32, i32
  }
  func.func @transform_2(%arg0: i32) -> (i32, i32) {
    %c0_i32 = arith.constant 0 : i32
    %c0_i32_0 = arith.constant 0 : i32
    %c0_i32_1 = arith.constant 0 : i32
    return %c0_i32, %c0_i32_0 : i32, i32
  }
  func.func @transform_3(%arg0: i32) -> (i32, i32) {
    %c0_i32 = arith.constant 0 : i32
    %c0_i32_0 = arith.constant 0 : i32
    %c0_i32_1 = arith.constant 0 : i32
    return %c0_i32, %c0_i32_0 : i32, i32
  }
  func.func @transform_4(%arg0: i32) -> (i32, i32) {
    %c0_i32 = arith.constant 0 : i32
    %c0_i32_0 = arith.constant 0 : i32
    %c0_i32_1 = arith.constant 0 : i32
    return %c0_i32, %c0_i32_0 : i32, i32
  }
  func.func @transform_5(%arg0: i32) -> (i32, i32) {
    %c0_i32 = arith.constant 0 : i32
    %c0_i32_0 = arith.constant 0 : i32
    return %arg0, %c0_i32 : i32, i32
  }
  func.func @transform_6(%arg0: i32) -> (i32, i32) {
    %c0_i32 = arith.constant 0 : i32
    %c0_i32_0 = arith.constant 0 : i32
    return %arg0, %c0_i32 : i32, i32
  }
}

</mosaic_0001>

<llo_original>
// kernel: mlp_forward.1
$region0: #{mlp_forward.1}
  #allocation0 [shape = 'u32[]', space=smem, size = 0x4, offset = 0x4, fixed_abs, tag = 'smem constant byte address 0x4 - core index']
  #allocation1 [shape = 'u32[144,128]{1,0:T(1,128)}', space=vmem, size = 0x12000, scoped, tag = 'internal scratch']
  %s0 = inlined_call_operand.vmem [shape: f32[24,16], index: 0, kind: input, shape index: {}]
  %s1 = inlined_call_operand.vmem [shape: f32[16,4], index: 1, kind: input, shape index: {}]
  %s2 = inlined_call_operand.vmem [shape: f32[1,4], index: 2, kind: input, shape index: {}]
  %s3 = inlined_call_operand.vmem [shape: f32[4,3], index: 3, kind: input, shape index: {}]
  %s4 = inlined_call_operand.vmem [shape: f32[1,3], index: 4, kind: input, shape index: {}]
  %s5 = inlined_call_operand.vmem [shape: f32[24,3], index: 5, kind: output, shape index: {0}]
  %s6 = inlined_call_operand.vmem [shape: f32[24,3], index: 6, kind: output, shape index: {1}]
  %7 = xla_tuple %s5, %s6
  %s8 = sld [smem:[#allocation0]]
  $region61: #{mlp_forward.1} parent=0
    _
  %s10 = ssub.s32 1, %s8
  %s11 = scalar_select 0, %s10, %s8
  loop: start=0, step=1, limit=5
  $region2: #{mlp_forward.1} parent=0 // loop_pre_header
    _
  $region3: #{mlp_forward.1} parent=0 // loop_header
    %s13 = sphi 0, %s17
    %p14 = scmp.ge.s32.totalorder %s13, 5
    %s23 = sphi 0, %s25
    %s26 = sphi 0, %s23
    %s27 = sphi 0, %s26
    %s43 = sphi 0, %s27
    %s47 = sphi 0, %s47
    %s49 = sphi 0, %s47
    %s50 = sphi 0, %s49
    %s64 = sphi 0, %s50
    %s68 = sphi 0, %s68
    %s70 = sphi 0, %s68
    %s71 = sphi 0, %s70
    %s85 = sphi 0, %s71
    %s89 = sphi 0, %s89
    %s91 = sphi 0, %s89
    %s92 = sphi 0, %s91
    %s106 = sphi 0, %s92
    %s110 = sphi 0, %s110
    %s112 = sphi 0, %s110
    %s113 = sphi 0, %s112
    %s127 = sphi 0, %s113
    %s133 = sphi 0, %s135
    %s136 = sphi 0, %s133
    %s137 = sphi 0, %s136
    %s153 = sphi 0, %s137
    %s159 = sphi 0, %s161
    %s162 = sphi 0, %s159
    %s163 = sphi 0, %s162
    %s179 = sphi 0, %s163
  $region4: #{mlp_forward.1} parent=0 // loop_header_branch
    %16 = sbr.rel (%p14) target = $region8
  $region5: #{mlp_forward.1} parent=0 // loop_body
    %s18 = ssub.s32 %s13, 1
    %s19 = ssub.s32 %s13, 2
    %s20 = sadd.s32 %s13, 1
    %s21 = ssub.s32 %s13, %s20
    %p22 = scmp.eq.s32.totalorder %s21, 0
    %s24 = sadd.s32 %s23, 1
    %s25 = scalar_select %p22, %s23, %s24
    %p28 = pneg %p22
    %p29 = scmp.eq.s32.totalorder %s13, 2
    %p30 = por %p28, %p29
    %p31 = scmp.ne.s32.totalorder %s23, %s26
    %p32 = scmp.eq.s32.totalorder %s13, 0
    %p33 = por %p31, %p32
    %p34 = scmp.ne.s32.totalorder %s23, %s26
    %p35 = scmp.eq.s32.totalorder %s18, 2
    %p36 = por %p34, %p35
    %p37 = scmp.ne.s32.totalorder %s26, %s27
    %p38 = scmp.eq.s32.totalorder %s18, 0
    %p39 = por %p37, %p38
    %p40 = scmp.ne.s32.totalorder %s26, %s27
    %p41 = scmp.eq.s32.totalorder %s19, 2
    %p42 = por %p40, %p41
    %p44 = scmp.ne.s32.totalorder %s27, %s43
    %p45 = scmp.eq.s32.totalorder %s19, 0
    %p46 = por %p44, %p45
    %s48 = sadd.s32 %s47, 1
    %p51 = scmp.eq.s32.totalorder %s13, 2
    %p52 = scmp.ne.s32.totalorder %s47, %s49
    %p53 = scmp.eq.s32.totalorder %s13, 0
    %p54 = por %p52, %p53
    %p55 = scmp.ne.s32.totalorder %s47, %s49
    %p56 = scmp.eq.s32.totalorder %s18, 2
    %p57 = por %p55, %p56
    %p58 = scmp.ne.s32.totalorder %s49, %s50
    %p59 = scmp.eq.s32.totalorder %s18, 0
    %p60 = por %p58, %p59
    %p61 = scmp.ne.s32.totalorder %s49, %s50
    %p62 = scmp.eq.s32.totalorder %s19, 2
    %p63 = por %p61, %p62
    %p65 = scmp.ne.s32.totalorder %s50, %s64
    %p66 = scmp.eq.s32.totalorder %s19, 0
    %p67 = por %p65, %p66
    %s69 = sadd.s32 %s68, 1
    %p72 = scmp.eq.s32.totalorder %s13, 2
    %p73 = scmp.ne.s32.totalorder %s68, %s70
    %p74 = scmp.eq.s32.totalorder %s13, 0
    %p75 = por %p73, %p74
    %p76 = scmp.ne.s32.totalorder %s68, %s70
    %p77 = scmp.eq.s32.totalorder %s18, 2
    %p78 = por %p76, %p77
    %p79 = scmp.ne.s32.totalorder %s70, %s71
    %p80 = scmp.eq.s32.totalorder %s18, 0
    %p81 = por %p79, %p80
    %p82 = scmp.ne.s32.totalorder %s70, %s71
    %p83 = scmp.eq.s32.totalorder %s19, 2
    %p84 = por %p82, %p83
    %p86 = scmp.ne.s32.totalorder %s71, %s85
    %p87 = scmp.eq.s32.totalorder %s19, 0
    %p88 = por %p86, %p87
    %s90 = sadd.s32 %s89, 1
    %p93 = scmp.eq.s32.totalorder %s13, 2
    %p94 = scmp.ne.s32.totalorder %s89, %s91
    %p95 = scmp.eq.s32.totalorder %s13, 0
    %p96 = por %p94, %p95
    %p97 = scmp.ne.s32.totalorder %s89, %s91
    %p98 = scmp.eq.s32.totalorder %s18, 2
    %p99 = por %p97, %p98
    %p100 = scmp.ne.s32.totalorder %s91, %s92
    %p101 = scmp.eq.s32.totalorder %s18, 0
    %p102 = por %p100, %p101
    %p103 = scmp.ne.s32.totalorder %s91, %s92
    %p104 = scmp.eq.s32.totalorder %s19, 2
    %p105 = por %p103, %p104
    %p107 = scmp.ne.s32.totalorder %s92, %s106
    %p108 = scmp.eq.s32.totalorder %s19, 0
    %p109 = por %p107, %p108
    %s111 = sadd.s32 %s110, 1
    %p114 = scmp.eq.s32.totalorder %s13, 2
    %p115 = scmp.ne.s32.totalorder %s110, %s112
    %p116 = scmp.eq.s32.totalorder %s13, 0
    %p117 = por %p115, %p116
    %p118 = scmp.ne.s32.totalorder %s110, %s112
    %p119 = scmp.eq.s32.totalorder %s18, 2
    %p120 = por %p118, %p119
    %p121 = scmp.ne.s32.totalorder %s112, %s113
    %p122 = scmp.eq.s32.totalorder %s18, 0
    %p123 = por %p121, %p122
    %p124 = scmp.ne.s32.totalorder %s112, %s113
    %p125 = scmp.eq.s32.totalorder %s19, 2
    %p126 = por %p124, %p125
    %p128 = scmp.ne.s32.totalorder %s113, %s127
    %p129 = scmp.eq.s32.totalorder %s19, 0
    %p130 = por %p128, %p129
    %s131 = ssub.s32 %s13, %s20
    %p132 = scmp.eq.s32.totalorder %s131, 0
    %s134 = sadd.s32 %s133, 1
    %s135 = scalar_select %p132, %s133, %s134
    %p138 = pneg %p132
    %p139 = scmp.eq.s32.totalorder %s13, 2
    %p140 = por %p138, %p139
    %p141 = scmp.ne.s32.totalorder %s133, %s136
    %p142 = scmp.eq.s32.totalorder %s13, 0
    %p143 = por %p141, %p142
    %p144 = scmp.ne.s32.totalorder %s133, %s136
    %p145 = scmp.eq.s32.totalorder %s18, 2
    %p146 = por %p144, %p145
    %p147 = scmp.ne.s32.totalorder %s136, %s137
    %p148 = scmp.eq.s32.totalorder %s18, 0
    %p149 = por %p147, %p148
    %p150 = scmp.ne.s32.totalorder %s136, %s137
    %p151 = scmp.eq.s32.totalorder %s19, 2
    %p152 = por %p150, %p151
    %p154 = scmp.ne.s32.totalorder %s137, %s153
    %p155 = scmp.eq.s32.totalorder %s19, 0
    %p156 = por %p154, %p155
    %s157 = ssub.s32 %s13, %s20
    %p158 = scmp.eq.s32.totalorder %s157, 0
    %s160 = sadd.s32 %s159, 1
    %s161 = scalar_select %p158, %s159, %s160
    %p164 = pneg %p158
    %p165 = scmp.eq.s32.totalorder %s13, 2
    %p166 = por %p164, %p165
    %p167 = scmp.ne.s32.totalorder %s159, %s162
    %p168 = scmp.eq.s32.totalorder %s13, 0
    %p169 = por %p167, %p168
    %p170 = scmp.ne.s32.totalorder %s159, %s162
    %p171 = scmp.eq.s32.totalorder %s18, 2
    %p172 = por %p170, %p171
    %p173 = scmp.ne.s32.totalorder %s162, %s163
    %p174 = scmp.eq.s32.totalorder %s18, 0
    %p175 = por %p173, %p174
    %p176 = scmp.ne.s32.totalorder %s162, %s163
    %p177 = scmp.eq.s32.totalorder %s19, 2
    %p178 = por %p176, %p177
    %p180 = scmp.ne.s32.totalorder %s163, %s179
    %p181 = scmp.eq.s32.totalorder %s19, 0
    %p182 = por %p180, %p181
    %p183 = scmp.le.s32.totalorder 1, %s13
    %p184 = scmp.lt.s32.totalorder %s13, 4
    %p185 = pnand %p183, %p184
    %p186 = pneg %p185
    // Predicated region
    $region9: #{mlp_forward.1} parent=5 // pred_check
      _
    $region10: #{mlp_forward.1} parent=5 // pred_check_branch
      %188 = sbr.rel (%p185) target = $region12
    $region11: #{mlp_forward.1} parent=5 // pred_region
      %s189 = ssub.s32 %s13, 1
      // Predicated region
      $region13: #{mlp_forward.1} parent=11 // pred_check
        %p190 = pneg %p60
      $region14: #{mlp_forward.1} parent=11 // pred_check_branch
        %192 = sbr.rel (%p190) target = $region16
      $region15: #{mlp_forward.1} parent=11 // pred_region
        _
      $region16: #{mlp_forward.1} parent=11 // pred_fallthru
        _
      // Predicated region
      $region17: #{mlp_forward.1} parent=11 // pred_check
        %p193 = pneg %p81
      $region18: #{mlp_forward.1} parent=11 // pred_check_branch
        %195 = sbr.rel (%p193) target = $region20
      $region19: #{mlp_forward.1} parent=11 // pred_region
        _
      $region20: #{mlp_forward.1} parent=11 // pred_fallthru
        _
      // Predicated region
      $region21: #{mlp_forward.1} parent=11 // pred_check
        %p196 = pneg %p102
      $region22: #{mlp_forward.1} parent=11 // pred_check_branch
        %198 = sbr.rel (%p196) target = $region24
      $region23: #{mlp_forward.1} parent=11 // pred_region
        _
      $region24: #{mlp_forward.1} parent=11 // pred_fallthru
        _
      // Predicated region
      $region25: #{mlp_forward.1} parent=11 // pred_check
        %p199 = pneg %p123
      $region26: #{mlp_forward.1} parent=11 // pred_check_branch
        %201 = sbr.rel (%p199) target = $region28
      $region27: #{mlp_forward.1} parent=11 // pred_region
        _
      $region28: #{mlp_forward.1} parent=11 // pred_fallthru
        _
    $region12: #{mlp_forward.1} parent=5 // pred_fallthru
      _
    %p202 = scmp.lt.s32.totalorder %s13, 3
    // Predicated region
    $region29: #{mlp_forward.1} parent=5 // pred_check
      %p203 = pneg %p202
    $region30: #{mlp_forward.1} parent=5 // pred_check_branch
      %205 = sbr.rel (%p203) target = $region32
    $region31: #{mlp_forward.1} parent=5 // pred_region
      // Predicated region
      $region33: #{mlp_forward.1} parent=31 // pred_check
        %p206 = pneg %p33
      $region34: #{mlp_forward.1} parent=31 // pred_check_branch
        %208 = sbr.rel (%p206) target = $region36
      $region35: #{mlp_forward.1} parent=31 // pred_region
        %p209 = scmp.lt.s32.totalorder %s13, 2
        %s210 = scalar_select %p209, %s13, 2
        %s211 = smul.addr %s210, 8
        %s212 = scalar_lea.vmem %s0, %s211
      $region36: #{mlp_forward.1} parent=31 // pred_fallthru
        _
    $region32: #{mlp_forward.1} parent=5 // pred_fallthru
      _
    %p213 = scmp.le.s32.totalorder 1, %s13
    %p214 = scmp.lt.s32.totalorder %s13, 4
    %p215 = pnand %p213, %p214
    %p216 = pneg %p215
    // Predicated region
    $region37: #{mlp_forward.1} parent=5 // pred_check
      _
    $region38: #{mlp_forward.1} parent=5 // pred_check_branch
      %218 = sbr.rel (%p215) target = $region40
    $region39: #{mlp_forward.1} parent=5 // pred_region
      %s219 = ssub.s32 %s13, 1
      %p220 = scmp.lt.s32.totalorder %s18, 2
      %s221 = scalar_select %p220, %s18, 2
      %s222 = smul.addr %s221, 8
      %s223 = scalar_lea.vmem %s0, %s222
      %p224 = pneg %p39
      %p225 = pneg %p36
      %p226 = pneg %p60
      %p227 = pneg %p57
      %p228 = pneg %p81
      %p229 = pneg %p78
      %p230 = pneg %p102
      %p231 = pneg %p99
      %p232 = pneg %p123
      %p233 = pneg %p120
      %p234 = pneg %p149
      %p235 = pneg %p146
      %p236 = scmp.lt.s32.totalorder %s18, 2
      %s237 = scalar_select %p236, %s18, 2
      %s238 = smul.addr %s237, 8
      %s239 = scalar_lea.vmem %s5, %s238
      %p240 = pneg %p175
      %p241 = pneg %p172
      %p242 = scmp.lt.s32.totalorder %s18, 2
      %s243 = scalar_select %p242, %s18, 2
      %s244 = smul.addr %s243, 8
      %s245 = scalar_lea.vmem %s6, %s244
      %p246 = scmp.lt.s32.totalorder %s18, 2
      %s247 = scalar_select %p246, %s18, 2
      %s248 = smul.addr %s247, 8
      %s249 = scalar_lea.vmem %s0, %s248
      %p250 = scmp.lt.s32.totalorder %s18, 2
      %s251 = scalar_select %p250, %s18, 2
      %s252 = smul.addr %s251, 8
      %s253 = scalar_lea.vmem %s5, %s252
      %p254 = scmp.lt.s32.totalorder %s18, 2
      %s255 = scalar_select %p254, %s18, 2
      %s256 = smul.addr %s255, 8
      %s257 = scalar_lea.vmem %s6, %s256
      %v258 = vld [vmem:[%s249] sm:$0xff]
      %v259 = vld [vmem:[%s1] sm:$0xff]
      %v260 = vld [vmem:[%s1 + $0x8] sm:$0xff]
      %v261 = vld [vmem:[%s2] sm:$0x1]
      %v263 = vlaneseq
      %v264 = vshrl.u32 %v263, 7
      %v265 = vsub.s32 0, %v264
      %v266 = vrot.slane %v261, %v265
      %vm268 = vcmask 130048
      %v270 = vsel %vm268, %v258, 0
      %272 = vmatprep.subr.mxu0 0.0
      %273 = vmatpush1.msra.mxu0 %v259
      %274 = vmatprep.subr.mxu0 0.0
      %275 = vmatpush1.msra.mxu0 %v260
      %276 = vmatprep.subr.mxu0 0.0
      %277 = vmatpush1.msra.mxu0 0.0
      %278 = vmatprep.subr.mxu0 0.0
      %279 = vmatpush1.msra.mxu0 0.0
      %280 = vmatprep.subr.mxu0 0.0
      %281 = vmatpush1.msra.mxu0 0.0
      %282 = vmatprep.subr.mxu0 0.0
      %283 = vmatpush1.msra.mxu0 0.0
      %284 = vmatprep.subr.mxu0 0.0
      %285 = vmatpush1.msra.mxu0 0.0
      %286 = vmatprep.subr.mxu0 0.0
      %287 = vmatpush1.msra.mxu0 0.0
      %288 = vmatprep.subr.mxu0 0.0
      %289 = vmatpush1.msra.mxu0 0.0
      %290 = vmatprep.subr.mxu0 0.0
      %291 = vmatpush1.msra.mxu0 0.0
      %292 = vmatprep.subr.mxu0 0.0
      %293 = vmatpush1.msra.mxu0 0.0
      %294 = vmatprep.subr.mxu0 0.0
      %295 = vmatpush1.msra.mxu0 0.0
      %296 = vmatprep.subr.mxu0 0.0
      %297 = vmatpush1.msra.mxu0 0.0
      %298 = vmatprep.subr.mxu0 0.0
      %299 = vmatpush1.msra.mxu0 0.0
      %300 = vmatprep.subr.mxu0 0.0
      %301 = vmatpush1.msra.mxu0 0.0
      %302 = vmatprep.subr.mxu0 0.0
      %303 = vmatpush1.msra.mxu0 0.0
      %304 = vmatprep.subr.mxu0 0.0
      %305 = vmatpush1.msra.mxu0 0.0
      %306 = vmatprep.subr.mxu0 0.0
      %307 = vmatpush1.msra.mxu0 0.0
      %308 = vmatprep.subr.mxu0 0.0
      %309 = vmatpush1.msra.mxu0 0.0
      %310 = vmatprep.subr.mxu0 0.0
      %311 = vmatpush1.msra.mxu0 0.0
      %312 = vmatprep.subr.mxu0 0.0
      %313 = vmatpush1.msra.mxu0 0.0
      %314 = vmatprep.subr.mxu0 0.0
      %315 = vmatpush1.msra.mxu0 0.0
      %316 = vmatprep.subr.mxu0 0.0
      %317 = vmatpush1.msra.mxu0 0.0
      %318 = vmatprep.subr.mxu0 0.0
      %319 = vmatpush1.msra.mxu0 0.0
      %320 = vmatprep.subr.mxu0 0.0
      %321 = vmatpush1.msra.mxu0 0.0
      %322 = vmatprep.subr.mxu0 0.0
      %323 = vmatpush1.msra.mxu0 0.0
      %324 = vmatprep.subr.mxu0 0.0
      %325 = vmatpush1.msra.mxu0 0.0
      %326 = vmatprep.subr.mxu0 0.0
      %327 = vmatpush1.msra.mxu0 0.0
      %328 = vmatprep.subr.mxu0 0.0
      %329 = vmatpush1.msra.mxu0 0.0
      %330 = vmatprep.subr.mxu0 0.0
      %331 = vmatpush1.msra.mxu0 0.0
      %332 = vmatprep.subr.mxu0 0.0
      %333 = vmatpush1.msra.mxu0 0.0
      %334 = vmatprep.subr.mxu0 0.0
      %335 = vmatpush1.msra.mxu0 0.0
      %336 = vmatprep.mubr.f32.mxu0 0.0
      %337 = vmatmul.mubr.f32.gmra.mrb[0].mxu0 %v270
      %v338 = vpop.f32.mrb[0].mxu0
      %v339 = vadd.f32 %v266, %v338
      %v340 = vpop.f32.mrb[0].mxu0
      %341 = vdwg.mxu0
      %v342 = vmax.f32 %v339, 0.0
      %v343 = vld [vmem:[%s4] sm:$0x1]
      %v345 = vlaneseq
      %v346 = vshrl.u32 %v345, 7
      %v347 = vsub.s32 0, %v346
      %v348 = vrot.slane %v343, %v347
      %v350 = vld [vmem:[%s3] sm:$0xf]
      %352 = vset.pattern.permute.xlu0 0
      %353 = vperm.xlu0 %352, %v342
      %v354 = vpop.permute.xlu0 %353
      %v356 = vlaneseq
      %v357 = vshrl.u32 %v356, 7
      %v358 = vsub.s32 0, %v357
      %v359 = vrot.slane %v350, %v358
      %v360 = vmul.f32 %v354, %v359
      %v361 = vadd.f32 %v348, %v360
      %362 = vset.pattern.permute.xlu0 1
      %363 = vperm.xlu0 %362, %v342
      %v364 = vpop.permute.xlu0 %363
      %v366 = vlaneseq
      %v367 = vshrl.u32 %v366, 7
      %v368 = vsub.s32 1, %v367
      %v369 = vrot.slane %v350, %v368
      %v370 = vmul.f32 %v364, %v369
      %v371 = vadd.f32 %v361, %v370
      %372 = vset.pattern.permute.xlu0 2
      %373 = vperm.xlu0 %372, %v342
      %v374 = vpop.permute.xlu0 %373
      %v376 = vlaneseq
      %v377 = vshrl.u32 %v376, 7
      %v378 = vsub.s32 2, %v377
      %v379 = vrot.slane %v350, %v378
      %v380 = vmul.f32 %v374, %v379
      %v381 = vadd.f32 %v371, %v380
      %382 = vset.pattern.permute.xlu0 3
      %383 = vperm.xlu0 %382, %v342
      %v384 = vpop.permute.xlu0 %383
      %v386 = vlaneseq
      %v387 = vshrl.u32 %v386, 7
      %v388 = vsub.s32 3, %v387
      %v389 = vrot.slane %v350, %v388
      %v390 = vmul.f32 %v384, %v389
      %v391 = vadd.f32 %v381, %v390
      %vm392 = vcmask 23552
      %393 = vst.msk [vmem:[%s257] sm:$0xff] %vm392, %v391
      %v394 = vxor.u32 %v391, 2147483648
      %v395 = vmul.f32 %v394, 1.442695
      %v396 = vpow.pop %v395
      %v397 = vadd.f32 %v396, 1.0
      %v398 = vrcp.pop %v397
      %v399 = vmul.f32 1.0, %v398
      %400 = vst.msk [vmem:[%s253] sm:$0xff] %vm392, %v399
      %p401 = scmp.lt.s32.totalorder %s18, 2
      %s402 = scalar_select %p401, %s18, 2
      %s403 = smul.addr %s402, 8
      %s404 = scalar_lea.vmem %s5, %s403
      %p405 = scmp.lt.s32.totalorder %s18, 2
      %s406 = scalar_select %p405, %s18, 2
      %s407 = smul.addr %s406, 8
      %s408 = scalar_lea.vmem %s6, %s407
      // Predicated region
      $region41: #{mlp_forward.1} parent=39 // pred_check
        %p409 = pneg %p146
      $region42: #{mlp_forward.1} parent=39 // pred_check_branch
        %411 = sbr.rel (%p409) target = $region44
      $region43: #{mlp_forward.1} parent=39 // pred_region
        _
      $region44: #{mlp_forward.1} parent=39 // pred_fallthru
        _
      // Predicated region
      $region45: #{mlp_forward.1} parent=39 // pred_check
        %p412 = pneg %p172
      $region46: #{mlp_forward.1} parent=39 // pred_check_branch
        %414 = sbr.rel (%p412) target = $region48
      $region47: #{mlp_forward.1} parent=39 // pred_region
        _
      $region48: #{mlp_forward.1} parent=39 // pred_fallthru
        _
    $region40: #{mlp_forward.1} parent=5 // pred_fallthru
      _
    %p415 = scmp.le.s32.totalorder 2, %s13
    // Predicated region
    $region49: #{mlp_forward.1} parent=5 // pred_check
      %p416 = pneg %p415
    $region50: #{mlp_forward.1} parent=5 // pred_check_branch
      %418 = sbr.rel (%p416) target = $region52
    $region51: #{mlp_forward.1} parent=5 // pred_region
      %s419 = ssub.s32 %s13, 2
      // Predicated region
      $region53: #{mlp_forward.1} parent=51 // pred_check
        %p420 = pneg %p152
      $region54: #{mlp_forward.1} parent=51 // pred_check_branch
        %422 = sbr.rel (%p420) target = $region56
      $region55: #{mlp_forward.1} parent=51 // pred_region
        %p423 = scmp.lt.s32.totalorder %s19, 2
        %s424 = scalar_select %p423, %s19, 2
        %s425 = smul.addr %s424, 8
        %s426 = scalar_lea.vmem %s5, %s425
      $region56: #{mlp_forward.1} parent=51 // pred_fallthru
        _
      // Predicated region
      $region57: #{mlp_forward.1} parent=51 // pred_check
        %p427 = pneg %p178
      $region58: #{mlp_forward.1} parent=51 // pred_check_branch
        %429 = sbr.rel (%p427) target = $region60
      $region59: #{mlp_forward.1} parent=51 // pred_region
        %p430 = scmp.lt.s32.totalorder %s19, 2
        %s431 = scalar_select %p430, %s19, 2
        %s432 = smul.addr %s431, 8
        %s433 = scalar_lea.vmem %s6, %s432
      $region60: #{mlp_forward.1} parent=51 // pred_fallthru
        _
    $region52: #{mlp_forward.1} parent=5 // pred_fallthru
      _
  $region6: #{mlp_forward.1} parent=0 // loop_footer
    %s17 = sadd.s32 1, %s13
  $region7: #{mlp_forward.1} parent=0 // loop_footer_branch
    %12 = sbr.rel target = $region3
  $region8: #{mlp_forward.1} parent=0 // loop_exit
    _

</llo_original>
